<compile_context>
chip_gen: v7x
topology: tpu7x:2x2x1
jax: 0.10.0
libtpu: 0.0.40
codegen_flags: <defaults>
</compile_context>

<pallas_src>
import functools
import math

import jax
import jax.numpy as jnp
from jax import lax
from jax.experimental import pallas as pl
from jax.experimental.pallas import tpu as pltpu


def _round_up(x, m):
    return ((x + m - 1) // m) * m


# -----------------------------------------------------------------------------
# Shared per-tile math (fused projection):
#   n_unit = n / max(||n||_2, 1e-12)
#   score  = || (h - t) + r - ((h - t)·n_unit) n_unit ||_p      (per row)
# algebraically identical to the reference h'/t' projection + ||h' + r - t'||_p.
# -----------------------------------------------------------------------------
def _score_math(h, t, r, n, p_norm):
    nsq = jnp.sum(n * n, axis=-1, keepdims=True)
    # clamping the *squared* norm at 1e-24 preserves the 1e-12 clamp on ||n||
    n_unit = n * lax.rsqrt(jnp.maximum(nsq, 1e-24))
    hm = h - t
    d = hm + r - jnp.sum(hm * n_unit, axis=-1, keepdims=True) * n_unit
    if p_norm == 1:
        return jnp.sum(jnp.abs(d), axis=-1, keepdims=True)
    return jnp.sqrt(jnp.sum(d * d, axis=-1, keepdims=True))


# -----------------------------------------------------------------------------
# Kernel A: small relation vocabulary.
# rtbl/ntbl are VMEM-resident bf16 tables of shape (2*rel_pad, hid):
# rows [0:rel_pad] hold the bf16 "hi" part, rows [rel_pad:2*rel_pad] the "mid"
# residual, so two bf16 MXU passes reconstruct ~16 mantissa bits of the f32
# values.  The per-tile (r, n) rows are gathered with a one-hot matmul.
# -----------------------------------------------------------------------------
def _transh_gather_kernel(h_ref, t_ref, idx_ref, rtbl_ref, ntbl_ref, score_ref,
                          *, p_norm, rel_pad):
    h = h_ref[...]                      # (tm, hid) f32
    t = t_ref[...]                      # (tm, hid) f32
    idx = idx_ref[...]                  # (tm, 1)  int32 relation ids
    tm = h.shape[0]

    rel_iota = lax.broadcasted_iota(jnp.int32, (tm, rel_pad), 1)
    one_hot = (idx == rel_iota).astype(jnp.bfloat16)          # (tm, rel_pad)

    # Static ref slices feed the MXU straight from VMEM (no full-table load).
    r = (jnp.dot(one_hot, rtbl_ref[0:rel_pad, :],
                 preferred_element_type=jnp.float32)
         + jnp.dot(one_hot, rtbl_ref[rel_pad:2 * rel_pad, :],
                   preferred_element_type=jnp.float32))        # (tm, hid) f32
    n = (jnp.dot(one_hot, ntbl_ref[0:rel_pad, :],
                 preferred_element_type=jnp.float32)
         + jnp.dot(one_hot, ntbl_ref[rel_pad:2 * rel_pad, :],
                   preferred_element_type=jnp.float32))        # (tm, hid) f32

    score = _score_math(h, t, r, n, p_norm)    # (tm, 1)
    score_ref[...] = jnp.transpose(score)      # (1, tm) lane-dense store


# -----------------------------------------------------------------------------
# Kernel B: large relation vocabulary fallback — stream pre-gathered r / n.
# -----------------------------------------------------------------------------
def _transh_stream_kernel(h_ref, t_ref, r_ref, n_ref, score_ref, *, p_norm):
    score = _score_math(h_ref[...], t_ref[...], r_ref[...], n_ref[...], p_norm)
    score_ref[...] = jnp.transpose(score)      # (1, tm) lane-dense store


# -----------------------------------------------------------------------------
# Wrapper: tiling + pallas_call (no HBM-side padding of h/t/r/n)
# -----------------------------------------------------------------------------
def transh_score(h, t, rel_emb, norm_vec, batch_r, *, p_norm=2):
    """TransH scores for (batch_seq, hidden) h/t and relation ids batch_r."""
    bs, hid = h.shape
    rel_num = rel_emb.shape[0]
    f32 = jnp.float32
    h = h.astype(f32)
    t = t.astype(f32)

    rel_pad = _round_up(rel_num, 128)
    # In-kernel one-hot gather beats streaming pre-gathered r/n as long as the
    # extra MXU MACs roughly hide under the HBM time they save; that crossover
    # scales with hid on all of v5e/v6e/v7x, so the threshold is rel_pad-vs-hid
    # (plus a VMEM bound on the resident bf16 tables).
    use_gather = (rel_pad <= min(8 * hid, 2048)) and (rel_pad * hid <= (1 << 19))

    if use_gather:
        def split_hi_mid(x):
            xp = jnp.pad(x.astype(f32), ((0, rel_pad - rel_num), (0, 0)))
            hi = xp.astype(jnp.bfloat16)
            mid = (xp - hi.astype(f32)).astype(jnp.bfloat16)
            return jnp.concatenate([hi, mid], axis=0)        # (2*rel_pad, hid)
        rtbl = split_hi_mid(rel_emb)
        ntbl = split_hi_mid(norm_vec)
        table_bytes = 2 * (2 * rel_pad) * hid * 2 * 2        # 2 tables, bf16, x2 buf
        n_streams = 2                                        # h, t
    else:
        r = jnp.take(rel_emb.astype(f32), batch_r, axis=0)
        n = jnp.take(norm_vec.astype(f32), batch_r, axis=0)
        rtbl = ntbl = None
        table_bytes = 0
        n_streams = 4                                        # h, t, r, n

    # ---- tile-size selection (bytes-based) -----------------------------------
    # Streams are double-buffered; large in-kernel intermediates round-trip VMEM
    # with their lanes padded to 128, so budget those too.  Stay well under the
    # 32 MiB scoped-VMEM limit (v7x-safe: 64 MiB total / 32 MiB scoped per core).
    lane_bytes = _round_up(hid, 128) * 4
    row_bytes = n_streams * 2 * hid * 4 + 6 * lane_bytes + 64
    if use_gather:
        row_bytes += 2 * rel_pad + 2 * lane_bytes            # one-hot (bf16) + r, n
    budget = (20 << 20) - table_bytes
    tm_vmem = max(128, budget // row_bytes)
    tm_target = max(128, (2 << 20) // (hid * 4))             # ~2 MiB / stream / tile
    tm_cap = max(128, (min(tm_vmem, tm_target, 8192) // 128) * 128)

    if bs <= 128:
        tm = _round_up(bs, 8)                                # single tile
    else:
        # >= 2 tiles so both v7x TensorCores get work and the pipeline overlaps;
        # multiple of 128 keeps the (1, tm) output block lane-dense & legal.
        tm = min(tm_cap, _round_up(pl.cdiv(bs, 2), 128))
    num_tiles = pl.cdiv(bs, tm)

    # ---- pallas_call ---------------------------------------------------------
    # NOTE: rows of the last (partial) input block past `bs` compute garbage
    # scores; they land at output positions >= bs and are sliced off below.
    grid = (num_tiles,)
    row_spec = pl.BlockSpec((tm, hid), lambda i: (i, 0))
    out_spec = pl.BlockSpec((1, tm), lambda i: (0, i))
    out_shape = jax.ShapeDtypeStruct((1, num_tiles * tm), f32)
    compiler_params = pltpu.CompilerParams(
        dimension_semantics=("parallel",),        # megacore sharding on v7x
        vmem_limit_bytes=32 * 1024 * 1024,        # explicit raise (v5e default 16 MiB)
    )

    if use_gather:
        idx = batch_r.astype(jnp.int32).reshape(bs, 1)
        kernel = functools.partial(_transh_gather_kernel, p_norm=p_norm,
                                   rel_pad=rel_pad)
        out = pl.pallas_call(
            kernel,
            out_shape=out_shape,
            grid=grid,
            in_specs=[
                row_spec,                                          # h
                row_spec,                                          # t
                pl.BlockSpec((tm, 1), lambda i: (i, 0)),           # relation ids
                pl.BlockSpec((2 * rel_pad, hid), lambda i: (0, 0)),  # rel table (resident)
                pl.BlockSpec((2 * rel_pad, hid), lambda i: (0, 0)),  # norm table (resident)
            ],
            out_specs=out_spec,
            compiler_params=compiler_params,
        )(h, t, idx, rtbl, ntbl)
    else:
        kernel = functools.partial(_transh_stream_kernel, p_norm=p_norm)
        out = pl.pallas_call(
            kernel,
            out_shape=out_shape,
            grid=grid,
            in_specs=[row_spec, row_spec, row_spec, row_spec],
            out_specs=out_spec,
            compiler_params=compiler_params,
        )(h, t, r, n)

    return out[0, :bs]


# -----------------------------------------------------------------------------
# Full forward (matches transH.forward): gather -> kernel score -> margin loss
# -----------------------------------------------------------------------------
def _margin_loss(score, cfg):
    # get_positive_score / get_negative_score / MarginRankingLoss(sum), y = -1:
    #   loss = sum(max(0, p_score - n_score + margin))
    p_score = score[: cfg["batch_size"]]
    n_score = jnp.mean(
        score[cfg["batch_size"]: cfg["batch_seq_size"]].reshape(
            -1, cfg["batch_size"]),
        axis=0)
    return jnp.sum(jnp.maximum(p_score - n_score + cfg["margin"], 0.0))


def transh_forward(params, batch_h, batch_t, batch_r, cfg):
    h = jnp.take(params["ent_embeddings"], batch_h, axis=0)
    t = jnp.take(params["ent_embeddings"], batch_t, axis=0)
    score = transh_score(h, t, params["rel_embeddings"], params["norm_vector"],
                         batch_r, p_norm=cfg["p_norm"])
    return _margin_loss(score, cfg)


# Pure-JAX reference (no Pallas), mirroring the PyTorch module exactly.
def transh_scores_ref(params, batch_h, batch_t, batch_r, p_norm):
    h = jnp.take(params["ent_embeddings"], batch_h, axis=0)
    t = jnp.take(params["ent_embeddings"], batch_t, axis=0)
    r = jnp.take(params["rel_embeddings"], batch_r, axis=0)
    n = jnp.take(params["norm_vector"], batch_r, axis=0)
    n_unit = n / jnp.maximum(
        jnp.sqrt(jnp.sum(n * n, axis=-1, keepdims=True)), 1e-12)
    h = h - jnp.sum(h * n_unit, -1, keepdims=True) * n_unit
    t = t - jnp.sum(t * n_unit, -1, keepdims=True) * n_unit
    d = h + r - t
    if p_norm == 1:
        return jnp.sum(jnp.abs(d), axis=-1)
    return jnp.sqrt(jnp.sum(d * d, axis=-1))


def transh_forward_ref(params, batch_h, batch_t, batch_r, cfg):
    score = transh_scores_ref(params, batch_h, batch_t, batch_r, cfg["p_norm"])
    return _margin_loss(score, cfg)


def xavier_uniform(key, shape):
    # nn.init.xavier_uniform_ on a (num_embeddings, embedding_dim) weight
    fan_out, fan_in = shape
    bound = math.sqrt(6.0 / (fan_in + fan_out))
    return jax.random.uniform(
        key, shape, dtype=jnp.float32, minval=-bound, maxval=bound)


if __name__ == "__main__":
    def run_case(cfg, case_id):
        key = jax.random.fold_in(jax.random.PRNGKey(0), case_id)
        k_ent, k_rel, k_nrm, k_h, k_t, k_r = jax.random.split(key, 6)
        params = {
            "ent_embeddings": xavier_uniform(
                k_ent, (cfg["ent_num"], cfg["hidden_size"])),
            "rel_embeddings": xavier_uniform(
                k_rel, (cfg["rel_num"], cfg["hidden_size"])),
            "norm_vector": xavier_uniform(
                k_nrm, (cfg["rel_num"], cfg["hidden_size"])),
        }
        batch_h = jax.random.randint(k_h, (cfg["batch_seq_size"],), 0,
                                     cfg["ent_num"])
        batch_t = jax.random.randint(k_t, (cfg["batch_seq_size"],), 0,
                                     cfg["ent_num"])
        batch_r = jax.random.randint(k_r, (cfg["batch_seq_size"],), 0,
                                     cfg["rel_num"])

        # per-example scores
        h = jnp.take(params["ent_embeddings"], batch_h, axis=0)
        t = jnp.take(params["ent_embeddings"], batch_t, axis=0)
        s = jax.block_until_ready(
            transh_score(h, t, params["rel_embeddings"], params["norm_vector"],
                         batch_r, p_norm=cfg["p_norm"]))
        s_ref = jax.block_until_ready(
            transh_scores_ref(params, batch_h, batch_t, batch_r, cfg["p_norm"]))
        assert jnp.allclose(s, s_ref, rtol=1e-4, atol=1e-4), \
            (case_id, float(jnp.max(jnp.abs(s - s_ref))))

        # full forward (margin ranking loss)
        loss = jax.block_until_ready(
            transh_forward(params, batch_h, batch_t, batch_r, cfg))
        loss_ref = jax.block_until_ready(
            transh_forward_ref(params, batch_h, batch_t, batch_r, cfg))
        assert jnp.allclose(loss, loss_ref, rtol=1e-3, atol=1e-3), \
            (case_id, float(loss), float(loss_ref))

    base = {"ent_num": 64, "hidden_size": 32, "margin": 1.0, "p_norm": 2}

    # 1) small batch, small rel vocab -> in-kernel one-hot MXU gather, 1 tile
    run_case(dict(base, rel_num=16, batch_size=8, batch_seq_size=24), 0)
    # 2) larger batch -> 2 tiles + partial final block, still the gather path
    run_case(dict(base, rel_num=16, batch_size=100, batch_seq_size=300), 1)
    # 3) large rel vocab -> streamed pre-gathered r / r_norm fallback, 2 tiles
    run_case(dict(base, rel_num=3000, batch_size=100, batch_seq_size=300), 2)
    # 4) exercise the p_norm=1 branch as well
    run_case(dict(base, rel_num=16, batch_size=8, batch_seq_size=24, p_norm=1), 3)

    print("KERNEL_OK")
</pallas_src>

<mosaic_0001>
module attributes {stable_mosaic.version = 11 : i64} {
  func.func @_transh_gather_kernel(%arg0: i32, %arg1: memref<24x32xf32, #tpu.memory_space<vmem>>, %arg2: memref<24x32xf32, #tpu.memory_space<vmem>>, %arg3: memref<24x1xi32, #tpu.memory_space<vmem>>, %arg4: memref<256x32xbf16, #tpu.memory_space<vmem>>, %arg5: memref<256x32xbf16, #tpu.memory_space<vmem>>, %arg6: memref<1x24xf32, #tpu.memory_space<vmem>>) attributes {dimension_semantics = [#tpu.dimension_semantics<parallel>], iteration_bounds = array<i64: 1>, scalar_prefetch = 0 : i64, scratch_operands = 0 : i64, tpu.core_type = #tpu.core_type<tc>, window_params = [{transform_indices = @transform_0, window_bounds = array<i64: 24, 32>}, {transform_indices = @transform_1, window_bounds = array<i64: 24, 32>}, {transform_indices = @transform_2, window_bounds = array<i64: 24, 1>}, {pipeline_mode = #tpu.pipeline_mode<synchronous>, transform_indices = @transform_3, window_bounds = array<i64: 256, 32>}, {pipeline_mode = #tpu.pipeline_mode<synchronous>, transform_indices = @transform_4, window_bounds = array<i64: 256, 32>}, {transform_indices = @transform_5, window_bounds = array<i64: 1, 24>}]} {
    %c0 = arith.constant 0 : index
    %c0_0 = arith.constant 0 : index
    %0 = vector.load %arg1[%c0, %c0_0] : memref<24x32xf32, #tpu.memory_space<vmem>>, vector<24x32xf32>
    %c0_1 = arith.constant 0 : index
    %c0_2 = arith.constant 0 : index
    %1 = vector.load %arg2[%c0_1, %c0_2] : memref<24x32xf32, #tpu.memory_space<vmem>>, vector<24x32xf32>
    %c0_3 = arith.constant 0 : index
    %c0_4 = arith.constant 0 : index
    %2 = vector.load %arg3[%c0_3, %c0_4] : memref<24x1xi32, #tpu.memory_space<vmem>>, vector<24x1xi32>
    %3 = tpu.iota {dimensions = array<i32: 1>} : vector<24x128xi32>
    %4 = vector.broadcast %2 : vector<24x1xi32> to vector<24x128xi32>
    %5 = arith.cmpi eq, %4, %3 : vector<24x128xi32>
    %6 = arith.extui %5 : vector<24x128xi1> to vector<24x128xi32>
    %7 = arith.sitofp %6 : vector<24x128xi32> to vector<24x128xf32>
    %8 = arith.truncf %7 : vector<24x128xf32> to vector<24x128xbf16>
    %c0_5 = arith.constant 0 : index
    %c0_6 = arith.constant 0 : index
    %9 = vector.load %arg4[%c0_5, %c0_6] : memref<256x32xbf16, #tpu.memory_space<vmem>>, vector<128x32xbf16>
    %cst = arith.constant dense<0.000000e+00> : vector<24x32xf32>
    %10 = tpu.matmul %8, %9, %cst {dimension_numbers = #tpu.dot_dimension_numbers<[1], [0], [0], [1], [0, 0, 1, 1], [], []>} : vector<24x128xbf16>, vector<128x32xbf16>, vector<24x32xf32> -> vector<24x32xf32>
    %c128 = arith.constant 128 : index
    %c0_7 = arith.constant 0 : index
    %11 = vector.load %arg4[%c128, %c0_7] : memref<256x32xbf16, #tpu.memory_space<vmem>>, vector<128x32xbf16>
    %cst_8 = arith.constant dense<0.000000e+00> : vector<24x32xf32>
    %12 = tpu.matmul %8, %11, %cst_8 {dimension_numbers = #tpu.dot_dimension_numbers<[1], [0], [0], [1], [0, 0, 1, 1], [], []>} : vector<24x128xbf16>, vector<128x32xbf16>, vector<24x32xf32> -> vector<24x32xf32>
    %13 = arith.addf %10, %12 : vector<24x32xf32>
    %c0_9 = arith.constant 0 : index
    %c0_10 = arith.constant 0 : index
    %14 = vector.load %arg5[%c0_9, %c0_10] : memref<256x32xbf16, #tpu.memory_space<vmem>>, vector<128x32xbf16>
    %cst_11 = arith.constant dense<0.000000e+00> : vector<24x32xf32>
    %15 = tpu.matmul %8, %14, %cst_11 {dimension_numbers = #tpu.dot_dimension_numbers<[1], [0], [0], [1], [0, 0, 1, 1], [], []>} : vector<24x128xbf16>, vector<128x32xbf16>, vector<24x32xf32> -> vector<24x32xf32>
    %c128_12 = arith.constant 128 : index
    %c0_13 = arith.constant 0 : index
    %16 = vector.load %arg5[%c128_12, %c0_13] : memref<256x32xbf16, #tpu.memory_space<vmem>>, vector<128x32xbf16>
    %cst_14 = arith.constant dense<0.000000e+00> : vector<24x32xf32>
    %17 = tpu.matmul %8, %16, %cst_14 {dimension_numbers = #tpu.dot_dimension_numbers<[1], [0], [0], [1], [0, 0, 1, 1], [], []>} : vector<24x128xbf16>, vector<128x32xbf16>, vector<24x32xf32> -> vector<24x32xf32>
    %18 = arith.addf %15, %17 : vector<24x32xf32>
    %19 = arith.mulf %18, %18 : vector<24x32xf32>
    %cst_15 = arith.constant dense<0.000000e+00> : vector<24xf32>
    %20 = vector.multi_reduction <add>, %19, %cst_15 [1] : vector<24x32xf32> to vector<24xf32>
    %21 = vector.shape_cast %20 : vector<24xf32> to vector<24x1xf32>
    %cst_16 = arith.constant 1.000000e-24 : f32
    %22 = vector.broadcast %cst_16 : f32 to vector<24x1xf32>
    %23 = arith.maximumf %21, %22 : vector<24x1xf32>
    %24 = math.rsqrt %23 : vector<24x1xf32>
    %25 = vector.broadcast %24 : vector<24x1xf32> to vector<24x32xf32>
    %26 = arith.mulf %18, %25 : vector<24x32xf32>
    %27 = arith.subf %0, %1 : vector<24x32xf32>
    %28 = arith.addf %27, %13 : vector<24x32xf32>
    %29 = arith.mulf %27, %26 : vector<24x32xf32>
    %cst_17 = arith.constant dense<0.000000e+00> : vector<24xf32>
    %30 = vector.multi_reduction <add>, %29, %cst_17 [1] : vector<24x32xf32> to vector<24xf32>
    %31 = vector.shape_cast %30 : vector<24xf32> to vector<24x1xf32>
    %32 = vector.broadcast %31 : vector<24x1xf32> to vector<24x32xf32>
    %33 = arith.mulf %32, %26 : vector<24x32xf32>
    %34 = arith.subf %28, %33 : vector<24x32xf32>
    %35 = arith.mulf %34, %34 : vector<24x32xf32>
    %cst_18 = arith.constant dense<0.000000e+00> : vector<24xf32>
    %36 = vector.multi_reduction <add>, %35, %cst_18 [1] : vector<24x32xf32> to vector<24xf32>
    %37 = vector.shape_cast %36 : vector<24xf32> to vector<24x1xf32>
    %38 = math.sqrt %37 : vector<24x1xf32>
    %39 = tpu.transpose %38, [1, 0] : vector<24x1xf32> -> vector<1x24xf32>
    %c0_19 = arith.constant 0 : index
    %c0_20 = arith.constant 0 : index
    %40 = vector.load %arg6[%c0_19, %c0_20] : memref<1x24xf32, #tpu.memory_space<vmem>>, vector<1x24xf32>
    tpu.vector_store %arg6[%c0_19, %c0_20], %39 {strides = array<i32>} : memref<1x24xf32, #tpu.memory_space<vmem>>, vector<1x24xf32>,
    return
  }
  func.func @transform_0(%arg0: i32) -> (i32, i32) {
    %c0_i32 = arith.constant 0 : i32
    %c0_i32_0 = arith.constant 0 : i32
    return %arg0, %c0_i32 : i32, i32
  }
  func.func @transform_1(%arg0: i32) -> (i32, i32) {
    %c0_i32 = arith.constant 0 : i32
    %c0_i32_0 = arith.constant 0 : i32
    return %arg0, %c0_i32 : i32, i32
  }
  func.func @transform_2(%arg0: i32) -> (i32, i32) {
    %c0_i32 = arith.constant 0 : i32
    %c0_i32_0 = arith.constant 0 : i32
    return %arg0, %c0_i32 : i32, i32
  }
  func.func @transform_3(%arg0: i32) -> (i32, i32) {
    %c0_i32 = arith.constant 0 : i32
    %c0_i32_0 = arith.constant 0 : i32
    %c0_i32_1 = arith.constant 0 : i32
    return %c0_i32, %c0_i32_0 : i32, i32
  }
  func.func @transform_4(%arg0: i32) -> (i32, i32) {
    %c0_i32 = arith.constant 0 : i32
    %c0_i32_0 = arith.constant 0 : i32
    %c0_i32_1 = arith.constant 0 : i32
    return %c0_i32, %c0_i32_0 : i32, i32
  }
  func.func @transform_5(%arg0: i32) -> (i32, i32) {
    %c0_i32 = arith.constant 0 : i32
    %c0_i32_0 = arith.constant 0 : i32
    return %c0_i32, %arg0 : i32, i32
  }
}

</mosaic_0001>

<llo_original>
// kernel: tpu_custom_call.1
$region0: #{tpu_custom_call.1}
  #allocation0 [shape = 'u32[]', space=smem, size = 0x4, offset = 0x4, fixed_abs, tag = 'smem constant byte address 0x4 - core index']
  #allocation1 [shape = 'u32[144,128]{1,0:T(1,128)}', space=vmem, size = 0x12000, scoped, tag = 'internal scratch']
  %s0 = inlined_call_operand.vmem [shape: f32[24,32], index: 0, kind: input, shape index: {}]
  %s1 = inlined_call_operand.vmem [shape: f32[24,32], index: 1, kind: input, shape index: {}]
  %s2 = inlined_call_operand.vmem [shape: s32[24,1], index: 2, kind: input, shape index: {}]
  %s3 = inlined_call_operand.vmem [shape: bf16[256,32], index: 3, kind: input, shape index: {}]
  %s4 = inlined_call_operand.vmem [shape: bf16[256,32], index: 4, kind: input, shape index: {}]
  %s5 = inlined_call_operand.hbm [shape: f32[1,24], index: 5, kind: output, shape index: {}]
  %s6 = sld [smem:[#allocation0]]
  $region30: #{tpu_custom_call.1} parent=0
    _
  %s8 = ssub.s32 1, %s6
  %s9 = scalar_select 0, %s8, %s6
  $region1: #{tpu_custom_call.1} parent=0
    #allocation2 [shape = 'u8[512]{0}', space=vmem, size = 0x400, scoped, tag = 'output window, operand 0, single buffered']
    #allocation3 [shape = 's32[1]{0}', space=sflag, size = 0x4, scoped, tag = 'scoped memory for tpu_custom_call.1']
    %10 = vsyncpa [#allocation3], 0
    // Predicated region
    $region2: #{tpu_custom_call.1} parent=1 // pred_check
      _
    $region3: #{tpu_custom_call.1} parent=1 // pred_check_branch
      %12 = sbr.rel (0) target = $region5
    $region4: #{tpu_custom_call.1} parent=1 // pred_region
      _
    $region5: #{tpu_custom_call.1} parent=1 // pred_fallthru
      _
    // Predicated region
    $region6: #{tpu_custom_call.1} parent=1 // pred_check
      _
    $region7: #{tpu_custom_call.1} parent=1 // pred_check_branch
      %14 = sbr.rel (0) target = $region9
    $region8: #{tpu_custom_call.1} parent=1 // pred_region
      _
    $region9: #{tpu_custom_call.1} parent=1 // pred_fallthru
      _
    // Predicated region
    $region10: #{tpu_custom_call.1} parent=1 // pred_check
      _
    $region11: #{tpu_custom_call.1} parent=1 // pred_check_branch
      %16 = sbr.rel (0) target = $region13
    $region12: #{tpu_custom_call.1} parent=1 // pred_region
      _
    $region13: #{tpu_custom_call.1} parent=1 // pred_fallthru
      _
    // Predicated region
    $region14: #{tpu_custom_call.1} parent=1 // pred_check
      _
    $region15: #{tpu_custom_call.1} parent=1 // pred_check_branch
      %18 = sbr.rel (0) target = $region17
    $region16: #{tpu_custom_call.1} parent=1 // pred_region
      _
    $region17: #{tpu_custom_call.1} parent=1 // pred_fallthru
      _
    // Predicated region
    $region18: #{tpu_custom_call.1} parent=1 // pred_check
      _
    $region19: #{tpu_custom_call.1} parent=1 // pred_check_branch
      %20 = sbr.rel (0) target = $region21
    $region20: #{tpu_custom_call.1} parent=1 // pred_region
      _
    $region21: #{tpu_custom_call.1} parent=1 // pred_fallthru
      _
    %v22 = vld [vmem:[%s0] sm:$0xff]
    %v23 = vld [vmem:[%s0 + $0x8] sm:$0xff]
    %v24 = vld [vmem:[%s0 + $0x10] sm:$0xff]
    %v25 = vld [vmem:[%s1] sm:$0xff]
    %v26 = vld [vmem:[%s1 + $0x8] sm:$0xff]
    %v27 = vld [vmem:[%s1 + $0x10] sm:$0xff]
    %v28 = vld [vmem:[%s2] sm:$0xff]
    %v29 = vld [vmem:[%s2 + $0x8] sm:$0xff]
    %v30 = vld [vmem:[%s2 + $0x10] sm:$0xff]
    %v31 = vlaneseq
    %v32 = vand.u32 %v31, 127
    %33 = vset.pattern.permute.xlu0 0
    %34 = vperm.xlu0 %33, %v28
    %v35 = vpop.permute.xlu0 %34
    %36 = vset.pattern.permute.xlu0 0
    %37 = vperm.xlu0 %36, %v29
    %v38 = vpop.permute.xlu0 %37
    %39 = vset.pattern.permute.xlu0 0
    %40 = vperm.xlu0 %39, %v30
    %v41 = vpop.permute.xlu0 %40
    %vm42 = vcmp.eq.s32.totalorder %v35, %v32
    %vm43 = vcmp.eq.s32.totalorder %v38, %v32
    %vm44 = vcmp.eq.s32.totalorder %v41, %v32
    %v45 = vsel %vm42, 1, 0
    %v46 = vsel %vm43, 1, 0
    %v47 = vsel %vm44, 1, 0
    %v48 = vcvt.s32.f32 %v45
    %v49 = vcvt.s32.f32 %v46
    %v50 = vcvt.s32.f32 %v47
    %v51 = vpack.c.bf16 %v49, %v48
    %v52 = vpack.c.bf16 %v50, %v50
    %v53 = vld [vmem:[%s3] sm:$0xf]
    %v54 = vld [vmem:[%s3 + $0x4] sm:$0xf]
    %v55 = vld [vmem:[%s3 + $0x8] sm:$0xf]
    %v56 = vld [vmem:[%s3 + $0xc] sm:$0xf]
    %v57 = vld [vmem:[%s3 + $0x10] sm:$0xf]
    %v58 = vld [vmem:[%s3 + $0x14] sm:$0xf]
    %v59 = vld [vmem:[%s3 + $0x18] sm:$0xf]
    %v60 = vld [vmem:[%s3 + $0x1c] sm:$0xf]
    %v61 = vld [vmem:[%s3 + $0x20] sm:$0xf]
    %v62 = vld [vmem:[%s3 + $0x24] sm:$0xf]
    %v63 = vld [vmem:[%s3 + $0x28] sm:$0xf]
    %v64 = vld [vmem:[%s3 + $0x2c] sm:$0xf]
    %v65 = vld [vmem:[%s3 + $0x30] sm:$0xf]
    %v66 = vld [vmem:[%s3 + $0x34] sm:$0xf]
    %v67 = vld [vmem:[%s3 + $0x38] sm:$0xf]
    %v68 = vld [vmem:[%s3 + $0x3c] sm:$0xf]
    %v69 = vld [vmem:[%s3 + $0x40] sm:$0xf]
    %v70 = vld [vmem:[%s3 + $0x44] sm:$0xf]
    %v71 = vld [vmem:[%s3 + $0x48] sm:$0xf]
    %v72 = vld [vmem:[%s3 + $0x4c] sm:$0xf]
    %v73 = vld [vmem:[%s3 + $0x50] sm:$0xf]
    %v74 = vld [vmem:[%s3 + $0x54] sm:$0xf]
    %v75 = vld [vmem:[%s3 + $0x58] sm:$0xf]
    %v76 = vld [vmem:[%s3 + $0x5c] sm:$0xf]
    %v77 = vld [vmem:[%s3 + $0x60] sm:$0xf]
    %v78 = vld [vmem:[%s3 + $0x64] sm:$0xf]
    %v79 = vld [vmem:[%s3 + $0x68] sm:$0xf]
    %v80 = vld [vmem:[%s3 + $0x6c] sm:$0xf]
    %v81 = vld [vmem:[%s3 + $0x70] sm:$0xf]
    %v82 = vld [vmem:[%s3 + $0x74] sm:$0xf]
    %v83 = vld [vmem:[%s3 + $0x78] sm:$0xf]
    %v84 = vld [vmem:[%s3 + $0x7c] sm:$0xf]
    %v101 = vunpack.c.l.b16 %v69
    %v102 = vunpack.c.l.b16 %v70
    %v103 = vunpack.c.l.b16 %v71
    %v104 = vunpack.c.l.b16 %v72
    %v105 = vunpack.c.l.b16 %v73
    %v106 = vunpack.c.l.b16 %v74
    %v107 = vunpack.c.l.b16 %v75
    %v108 = vunpack.c.l.b16 %v76
    %v109 = vunpack.c.l.b16 %v77
    %v110 = vunpack.c.l.b16 %v78
    %v111 = vunpack.c.l.b16 %v79
    %v112 = vunpack.c.l.b16 %v80
    %v113 = vunpack.c.l.b16 %v81
    %v114 = vunpack.c.l.b16 %v82
    %v115 = vunpack.c.l.b16 %v83
    %v116 = vunpack.c.l.b16 %v84
    %v117 = vpack.c.b16 %v102, %v101
    %v118 = vpack.c.b16 %v104, %v103
    %v119 = vpack.c.b16 %v106, %v105
    %v120 = vpack.c.b16 %v108, %v107
    %v121 = vpack.c.b16 %v110, %v109
    %v122 = vpack.c.b16 %v112, %v111
    %v123 = vpack.c.b16 %v114, %v113
    %v124 = vpack.c.b16 %v116, %v115
    %133 = vmatprep.subr.bf16.mxu0 0
    %134 = vmatpush1.bf16.msra.mxu0 %v117
    %135 = vmatprep.subr.bf16.mxu0 0
    %136 = vmatpush1.bf16.msra.mxu0 %v118
    %137 = vmatprep.subr.bf16.mxu0 0
    %138 = vmatpush1.bf16.msra.mxu0 %v119
    %139 = vmatprep.subr.bf16.mxu0 0
    %140 = vmatpush1.bf16.msra.mxu0 %v120
    %141 = vmatprep.subr.bf16.mxu0 0
    %142 = vmatpush1.bf16.msra.mxu0 %v121
    %143 = vmatprep.subr.bf16.mxu0 0
    %144 = vmatpush1.bf16.msra.mxu0 %v122
    %145 = vmatprep.subr.bf16.mxu0 0
    %146 = vmatpush1.bf16.msra.mxu0 %v123
    %147 = vmatprep.subr.bf16.mxu0 0
    %148 = vmatpush1.bf16.msra.mxu0 %v124
    %149 = vmatprep.subr.bf16.mxu0 0
    %150 = vmatpush1.bf16.msra.mxu0 0
    %151 = vmatprep.subr.bf16.mxu0 0
    %152 = vmatpush1.bf16.msra.mxu0 0
    %153 = vmatprep.subr.bf16.mxu0 0
    %154 = vmatpush1.bf16.msra.mxu0 0
    %155 = vmatprep.subr.bf16.mxu0 0
    %156 = vmatpush1.bf16.msra.mxu0 0
    %157 = vmatprep.subr.bf16.mxu0 0
    %158 = vmatpush1.bf16.msra.mxu0 0
    %159 = vmatprep.subr.bf16.mxu0 0
    %160 = vmatpush1.bf16.msra.mxu0 0
    %161 = vmatprep.subr.bf16.mxu0 0
    %162 = vmatpush1.bf16.msra.mxu0 0
    %163 = vmatprep.subr.bf16.mxu0 0
    %164 = vmatpush1.bf16.msra.mxu0 0
    %165 = vmatprep.mubr.bf16.mxu0 0
    %166 = vmatmul.mubr.bf16.gmra.mrb[0].mxu0 %v51
    %v167 = vpop.f32.mrb[0].mxu0
    %v168 = vadd.f32 0.0, %v167
    %v169 = vpop.f32.mrb[0].mxu0
    %v170 = vpop.f32.mrb[0].mxu0
    %v171 = vadd.f32 0.0, %v170
    %v172 = vpop.f32.mrb[0].mxu0
    %173 = vmatprep.mubr.bf16.mxu0 0
    %174 = vmatmul.mubr.bf16.gmra.mrb[0].mxu0 %v52
    %v175 = vpop.f32.mrb[0].mxu0
    %v176 = vadd.f32 0.0, %v175
    %v177 = vpop.f32.mrb[0].mxu0
    %v178 = vpop.f32.mrb[0].mxu0
    %v179 = vpop.f32.mrb[0].mxu0
    %180 = vdwg.mxu0
    %v197 = vunpack.c.l.b16 %v53
    %v198 = vunpack.c.l.b16 %v54
    %v199 = vunpack.c.l.b16 %v55
    %v200 = vunpack.c.l.b16 %v56
    %v201 = vunpack.c.l.b16 %v57
    %v202 = vunpack.c.l.b16 %v58
    %v203 = vunpack.c.l.b16 %v59
    %v204 = vunpack.c.l.b16 %v60
    %v205 = vunpack.c.l.b16 %v61
    %v206 = vunpack.c.l.b16 %v62
    %v207 = vunpack.c.l.b16 %v63
    %v208 = vunpack.c.l.b16 %v64
    %v209 = vunpack.c.l.b16 %v65
    %v210 = vunpack.c.l.b16 %v66
    %v211 = vunpack.c.l.b16 %v67
    %v212 = vunpack.c.l.b16 %v68
    %v213 = vpack.c.b16 %v198, %v197
    %v214 = vpack.c.b16 %v200, %v199
    %v215 = vpack.c.b16 %v202, %v201
    %v216 = vpack.c.b16 %v204, %v203
    %v217 = vpack.c.b16 %v206, %v205
    %v218 = vpack.c.b16 %v208, %v207
    %v219 = vpack.c.b16 %v210, %v209
    %v220 = vpack.c.b16 %v212, %v211
    %229 = vmatprep.subr.bf16.mxu0 0
    %230 = vmatpush1.bf16.msra.mxu0 %v213
    %231 = vmatprep.subr.bf16.mxu0 0
    %232 = vmatpush1.bf16.msra.mxu0 %v214
    %233 = vmatprep.subr.bf16.mxu0 0
    %234 = vmatpush1.bf16.msra.mxu0 %v215
    %235 = vmatprep.subr.bf16.mxu0 0
    %236 = vmatpush1.bf16.msra.mxu0 %v216
    %237 = vmatprep.subr.bf16.mxu0 0
    %238 = vmatpush1.bf16.msra.mxu0 %v217
    %239 = vmatprep.subr.bf16.mxu0 0
    %240 = vmatpush1.bf16.msra.mxu0 %v218
    %241 = vmatprep.subr.bf16.mxu0 0
    %242 = vmatpush1.bf16.msra.mxu0 %v219
    %243 = vmatprep.subr.bf16.mxu0 0
    %244 = vmatpush1.bf16.msra.mxu0 %v220
    %245 = vmatprep.subr.bf16.mxu0 0
    %246 = vmatpush1.bf16.msra.mxu0 0
    %247 = vmatprep.subr.bf16.mxu0 0
    %248 = vmatpush1.bf16.msra.mxu0 0
    %249 = vmatprep.subr.bf16.mxu0 0
    %250 = vmatpush1.bf16.msra.mxu0 0
    %251 = vmatprep.subr.bf16.mxu0 0
    %252 = vmatpush1.bf16.msra.mxu0 0
    %253 = vmatprep.subr.bf16.mxu0 0
    %254 = vmatpush1.bf16.msra.mxu0 0
    %255 = vmatprep.subr.bf16.mxu0 0
    %256 = vmatpush1.bf16.msra.mxu0 0
    %257 = vmatprep.subr.bf16.mxu0 0
    %258 = vmatpush1.bf16.msra.mxu0 0
    %259 = vmatprep.subr.bf16.mxu0 0
    %260 = vmatpush1.bf16.msra.mxu0 0
    %261 = vmatprep.mubr.bf16.mxu0 0
    %262 = vmatmul.mubr.bf16.gmra.mrb[0].mxu0 %v51
    %v263 = vpop.f32.mrb[0].mxu0
    %v264 = vadd.f32 %v168, %v263
    %v265 = vpop.f32.mrb[0].mxu0
    %v266 = vpop.f32.mrb[0].mxu0
    %v267 = vadd.f32 %v171, %v266
    %v268 = vpop.f32.mrb[0].mxu0
    %269 = vmatprep.mubr.bf16.mxu0 0
    %270 = vmatmul.mubr.bf16.gmra.mrb[0].mxu0 %v52
    %v271 = vpop.f32.mrb[0].mxu0
    %v272 = vadd.f32 %v176, %v271
    %v273 = vpop.f32.mrb[0].mxu0
    %v274 = vpop.f32.mrb[0].mxu0
    %v275 = vpop.f32.mrb[0].mxu0
    %276 = vdwg.mxu0
    %v277 = vld [vmem:[%s4] sm:$0xf]
    %v278 = vld [vmem:[%s4 + $0x4] sm:$0xf]
    %v279 = vld [vmem:[%s4 + $0x8] sm:$0xf]
    %v280 = vld [vmem:[%s4 + $0xc] sm:$0xf]
    %v281 = vld [vmem:[%s4 + $0x10] sm:$0xf]
    %v282 = vld [vmem:[%s4 + $0x14] sm:$0xf]
    %v283 = vld [vmem:[%s4 + $0x18] sm:$0xf]
    %v284 = vld [vmem:[%s4 + $0x1c] sm:$0xf]
    %v285 = vld [vmem:[%s4 + $0x20] sm:$0xf]
    %v286 = vld [vmem:[%s4 + $0x24] sm:$0xf]
    %v287 = vld [vmem:[%s4 + $0x28] sm:$0xf]
    %v288 = vld [vmem:[%s4 + $0x2c] sm:$0xf]
    %v289 = vld [vmem:[%s4 + $0x30] sm:$0xf]
    %v290 = vld [vmem:[%s4 + $0x34] sm:$0xf]
    %v291 = vld [vmem:[%s4 + $0x38] sm:$0xf]
    %v292 = vld [vmem:[%s4 + $0x3c] sm:$0xf]
    %v293 = vld [vmem:[%s4 + $0x40] sm:$0xf]
    %v294 = vld [vmem:[%s4 + $0x44] sm:$0xf]
    %v295 = vld [vmem:[%s4 + $0x48] sm:$0xf]
    %v296 = vld [vmem:[%s4 + $0x4c] sm:$0xf]
    %v297 = vld [vmem:[%s4 + $0x50] sm:$0xf]
    %v298 = vld [vmem:[%s4 + $0x54] sm:$0xf]
    %v299 = vld [vmem:[%s4 + $0x58] sm:$0xf]
    %v300 = vld [vmem:[%s4 + $0x5c] sm:$0xf]
    %v301 = vld [vmem:[%s4 + $0x60] sm:$0xf]
    %v302 = vld [vmem:[%s4 + $0x64] sm:$0xf]
    %v303 = vld [vmem:[%s4 + $0x68] sm:$0xf]
    %v304 = vld [vmem:[%s4 + $0x6c] sm:$0xf]
    %v305 = vld [vmem:[%s4 + $0x70] sm:$0xf]
    %v306 = vld [vmem:[%s4 + $0x74] sm:$0xf]
    %v307 = vld [vmem:[%s4 + $0x78] sm:$0xf]
    %v308 = vld [vmem:[%s4 + $0x7c] sm:$0xf]
    %v325 = vunpack.c.l.b16 %v293
    %v326 = vunpack.c.l.b16 %v294
    %v327 = vunpack.c.l.b16 %v295
    %v328 = vunpack.c.l.b16 %v296
    %v329 = vunpack.c.l.b16 %v297
    %v330 = vunpack.c.l.b16 %v298
    %v331 = vunpack.c.l.b16 %v299
    %v332 = vunpack.c.l.b16 %v300
    %v333 = vunpack.c.l.b16 %v301
    %v334 = vunpack.c.l.b16 %v302
    %v335 = vunpack.c.l.b16 %v303
    %v336 = vunpack.c.l.b16 %v304
    %v337 = vunpack.c.l.b16 %v305
    %v338 = vunpack.c.l.b16 %v306
    %v339 = vunpack.c.l.b16 %v307
    %v340 = vunpack.c.l.b16 %v308
    %v341 = vpack.c.b16 %v326, %v325
    %v342 = vpack.c.b16 %v328, %v327
    %v343 = vpack.c.b16 %v330, %v329
    %v344 = vpack.c.b16 %v332, %v331
    %v345 = vpack.c.b16 %v334, %v333
    %v346 = vpack.c.b16 %v336, %v335
    %v347 = vpack.c.b16 %v338, %v337
    %v348 = vpack.c.b16 %v340, %v339
    %357 = vmatprep.subr.bf16.mxu0 0
    %358 = vmatpush1.bf16.msra.mxu0 %v341
    %359 = vmatprep.subr.bf16.mxu0 0
    %360 = vmatpush1.bf16.msra.mxu0 %v342
    %361 = vmatprep.subr.bf16.mxu0 0
    %362 = vmatpush1.bf16.msra.mxu0 %v343
    %363 = vmatprep.subr.bf16.mxu0 0
    %364 = vmatpush1.bf16.msra.mxu0 %v344
    %365 = vmatprep.subr.bf16.mxu0 0
    %366 = vmatpush1.bf16.msra.mxu0 %v345
    %367 = vmatprep.subr.bf16.mxu0 0
    %368 = vmatpush1.bf16.msra.mxu0 %v346
    %369 = vmatprep.subr.bf16.mxu0 0
    %370 = vmatpush1.bf16.msra.mxu0 %v347
    %371 = vmatprep.subr.bf16.mxu0 0
    %372 = vmatpush1.bf16.msra.mxu0 %v348
    %373 = vmatprep.subr.bf16.mxu0 0
    %374 = vmatpush1.bf16.msra.mxu0 0
    %375 = vmatprep.subr.bf16.mxu0 0
    %376 = vmatpush1.bf16.msra.mxu0 0
    %377 = vmatprep.subr.bf16.mxu0 0
    %378 = vmatpush1.bf16.msra.mxu0 0
    %379 = vmatprep.subr.bf16.mxu0 0
    %380 = vmatpush1.bf16.msra.mxu0 0
    %381 = vmatprep.subr.bf16.mxu0 0
    %382 = vmatpush1.bf16.msra.mxu0 0
    %383 = vmatprep.subr.bf16.mxu0 0
    %384 = vmatpush1.bf16.msra.mxu0 0
    %385 = vmatprep.subr.bf16.mxu0 0
    %386 = vmatpush1.bf16.msra.mxu0 0
    %387 = vmatprep.subr.bf16.mxu0 0
    %388 = vmatpush1.bf16.msra.mxu0 0
    %389 = vmatprep.mubr.bf16.mxu0 0
    %390 = vmatmul.mubr.bf16.gmra.mrb[0].mxu0 %v51
    %v391 = vpop.f32.mrb[0].mxu0
    %v392 = vadd.f32 0.0, %v391
    %v393 = vpop.f32.mrb[0].mxu0
    %v394 = vpop.f32.mrb[0].mxu0
    %v395 = vadd.f32 0.0, %v394
    %v396 = vpop.f32.mrb[0].mxu0
    %397 = vmatprep.mubr.bf16.mxu0 0
    %398 = vmatmul.mubr.bf16.gmra.mrb[0].mxu0 %v52
    %v399 = vpop.f32.mrb[0].mxu0
    %v400 = vadd.f32 0.0, %v399
    %v401 = vpop.f32.mrb[0].mxu0
    %v402 = vpop.f32.mrb[0].mxu0
    %v403 = vpop.f32.mrb[0].mxu0
    %404 = vdwg.mxu0
    %v421 = vunpack.c.l.b16 %v277
    %v422 = vunpack.c.l.b16 %v278
    %v423 = vunpack.c.l.b16 %v279
    %v424 = vunpack.c.l.b16 %v280
    %v425 = vunpack.c.l.b16 %v281
    %v426 = vunpack.c.l.b16 %v282
    %v427 = vunpack.c.l.b16 %v283
    %v428 = vunpack.c.l.b16 %v284
    %v429 = vunpack.c.l.b16 %v285
    %v430 = vunpack.c.l.b16 %v286
    %v431 = vunpack.c.l.b16 %v287
    %v432 = vunpack.c.l.b16 %v288
    %v433 = vunpack.c.l.b16 %v289
    %v434 = vunpack.c.l.b16 %v290
    %v435 = vunpack.c.l.b16 %v291
    %v436 = vunpack.c.l.b16 %v292
    %v437 = vpack.c.b16 %v422, %v421
    %v438 = vpack.c.b16 %v424, %v423
    %v439 = vpack.c.b16 %v426, %v425
    %v440 = vpack.c.b16 %v428, %v427
    %v441 = vpack.c.b16 %v430, %v429
    %v442 = vpack.c.b16 %v432, %v431
    %v443 = vpack.c.b16 %v434, %v433
    %v444 = vpack.c.b16 %v436, %v435
    %453 = vmatprep.subr.bf16.mxu0 0
    %454 = vmatpush1.bf16.msra.mxu0 %v437
    %455 = vmatprep.subr.bf16.mxu0 0
    %456 = vmatpush1.bf16.msra.mxu0 %v438
    %457 = vmatprep.subr.bf16.mxu0 0
    %458 = vmatpush1.bf16.msra.mxu0 %v439
    %459 = vmatprep.subr.bf16.mxu0 0
    %460 = vmatpush1.bf16.msra.mxu0 %v440
    %461 = vmatprep.subr.bf16.mxu0 0
    %462 = vmatpush1.bf16.msra.mxu0 %v441
    %463 = vmatprep.subr.bf16.mxu0 0
    %464 = vmatpush1.bf16.msra.mxu0 %v442
    %465 = vmatprep.subr.bf16.mxu0 0
    %466 = vmatpush1.bf16.msra.mxu0 %v443
    %467 = vmatprep.subr.bf16.mxu0 0
    %468 = vmatpush1.bf16.msra.mxu0 %v444
    %469 = vmatprep.subr.bf16.mxu0 0
    %470 = vmatpush1.bf16.msra.mxu0 0
    %471 = vmatprep.subr.bf16.mxu0 0
    %472 = vmatpush1.bf16.msra.mxu0 0
    %473 = vmatprep.subr.bf16.mxu0 0
    %474 = vmatpush1.bf16.msra.mxu0 0
    %475 = vmatprep.subr.bf16.mxu0 0
    %476 = vmatpush1.bf16.msra.mxu0 0
    %477 = vmatprep.subr.bf16.mxu0 0
    %478 = vmatpush1.bf16.msra.mxu0 0
    %479 = vmatprep.subr.bf16.mxu0 0
    %480 = vmatpush1.bf16.msra.mxu0 0
    %481 = vmatprep.subr.bf16.mxu0 0
    %482 = vmatpush1.bf16.msra.mxu0 0
    %483 = vmatprep.subr.bf16.mxu0 0
    %484 = vmatpush1.bf16.msra.mxu0 0
    %485 = vmatprep.mubr.bf16.mxu0 0
    %486 = vmatmul.mubr.bf16.gmra.mrb[0].mxu0 %v51
    %v487 = vpop.f32.mrb[0].mxu0
    %v488 = vadd.f32 %v392, %v487
    %v489 = vpop.f32.mrb[0].mxu0
    %v490 = vpop.f32.mrb[0].mxu0
    %v491 = vadd.f32 %v395, %v490
    %v492 = vpop.f32.mrb[0].mxu0
    %493 = vmatprep.mubr.bf16.mxu0 0
    %494 = vmatmul.mubr.bf16.gmra.mrb[0].mxu0 %v52
    %v495 = vpop.f32.mrb[0].mxu0
    %v496 = vadd.f32 %v400, %v495
    %v497 = vpop.f32.mrb[0].mxu0
    %v498 = vpop.f32.mrb[0].mxu0
    %v499 = vpop.f32.mrb[0].mxu0
    %500 = vdwg.mxu0
    %v501 = vmul.f32 %v488, %v488
    %v502 = vmul.f32 %v491, %v491
    %v503 = vmul.f32 %v496, %v496
    %vm504 = vcmask 261120
    %v505 = vsel %vm504, %v501, 0.0
    %506 = vadd.xlane.f32.xlu0 %v505
    %v507 = vpop.xlane.xlu0 %506
    %v508 = vsel %vm504, %v502, 0.0
    %509 = vadd.xlane.f32.xlu0 %v508
    %v510 = vpop.xlane.xlu0 %509
    %v511 = vsel %vm504, %v503, 0.0
    %512 = vadd.xlane.f32.xlu0 %v511
    %v513 = vpop.xlane.xlu0 %512
    %v514 = vmax.f32 %v507, 1e-24
    %v515 = vmax.f32 %v510, 1e-24
    %v516 = vmax.f32 %v513, 1e-24
    %v517 = vrsqrt.pop %v514
    %v518 = vrsqrt.pop %v515
    %v519 = vrsqrt.pop %v516
    %v520 = vmul.f32 %v488, %v517
    %v521 = vmul.f32 %v491, %v518
    %v522 = vmul.f32 %v496, %v519
    %v523 = vsub.f32 %v22, %v25
    %v524 = vsub.f32 %v23, %v26
    %v525 = vsub.f32 %v24, %v27
    %v526 = vadd.f32 %v523, %v264
    %v527 = vadd.f32 %v524, %v267
    %v528 = vadd.f32 %v525, %v272
    %v529 = vmul.f32 %v523, %v520
    %v530 = vmul.f32 %v524, %v521
    %v531 = vmul.f32 %v525, %v522
    %v532 = vsel %vm504, %v529, 0.0
    %533 = vadd.xlane.f32.xlu0 %v532
    %v534 = vpop.xlane.xlu0 %533
    %v535 = vsel %vm504, %v530, 0.0
    %536 = vadd.xlane.f32.xlu0 %v535
    %v537 = vpop.xlane.xlu0 %536
    %v538 = vsel %vm504, %v531, 0.0
    %539 = vadd.xlane.f32.xlu0 %v538
    %v540 = vpop.xlane.xlu0 %539
    %v541 = vmul.f32 %v534, %v520
    %v542 = vmul.f32 %v537, %v521
    %v543 = vmul.f32 %v540, %v522
    %v544 = vsub.f32 %v526, %v541
    %v545 = vsub.f32 %v527, %v542
    %v546 = vsub.f32 %v528, %v543
    %v547 = vmul.f32 %v544, %v544
    %v548 = vmul.f32 %v545, %v545
    %v549 = vmul.f32 %v546, %v546
    %v550 = vsel %vm504, %v547, 0.0
    %551 = vadd.xlane.f32.xlu0 %v550
    %v552 = vpop.xlane.xlu0 %551
    %v553 = vsel %vm504, %v548, 0.0
    %554 = vadd.xlane.f32.xlu0 %v553
    %v555 = vpop.xlane.xlu0 %554
    %v556 = vsel %vm504, %v549, 0.0
    %557 = vadd.xlane.f32.xlu0 %v556
    %v558 = vpop.xlane.xlu0 %557
    %v559 = vrsqrt.pop %v552
    %v560 = vmul.f32 %v552, %v559
    %vm561 = vcmp.eq.f32.partialorder %v552, inf
    %v562 = vsel %vm561, %v552, %v560
    %vm563 = vcmp.eq.f32.partialorder %v552, 0.0
    %v564 = vand.u32 %v552, 2147483648
    %v565 = vsel %vm563, %v564, %v562
    %v566 = vrsqrt.pop %v555
    %v567 = vmul.f32 %v555, %v566
    %vm568 = vcmp.eq.f32.partialorder %v555, inf
    %v569 = vsel %vm568, %v555, %v567
    %vm570 = vcmp.eq.f32.partialorder %v555, 0.0
    %v571 = vand.u32 %v555, 2147483648
    %v572 = vsel %vm570, %v571, %v569
    %v573 = vrsqrt.pop %v558
    %v574 = vmul.f32 %v558, %v573
    %vm575 = vcmp.eq.f32.partialorder %v558, inf
    %v576 = vsel %vm575, %v558, %v574
    %vm577 = vcmp.eq.f32.partialorder %v558, 0.0
    %v578 = vand.u32 %v558, 2147483648
    %v579 = vsel %vm577, %v578, %v576
    %580 = vxpose.xlu0.b32.start [1/16] %v565, 128
    %581 = vxpose.xlu0.b32.cont [2/16] %v572, 128
    %582 = vxpose.xlu0.b32.cont [3/16] %v579, 128
    %583 = vxpose.xlu0.b32.cont [4/16] 0.0, 128
    %584 = vxpose.xlu0.b32.cont [5/16] 0.0, 128
    %585 = vxpose.xlu0.b32.cont [6/16] 0.0, 128
    %586 = vxpose.xlu0.b32.cont [7/16] 0.0, 128
    %587 = vxpose.xlu0.b32.cont [8/16] 0.0, 128
    %588 = vxpose.xlu0.b32.cont [9/16] 0.0, 128
    %589 = vxpose.xlu0.b32.cont [10/16] 0.0, 128
    %590 = vxpose.xlu0.b32.cont [11/16] 0.0, 128
    %591 = vxpose.xlu0.b32.cont [12/16] 0.0, 128
    %592 = vxpose.xlu0.b32.cont [13/16] 0.0, 128
    %593 = vxpose.xlu0.b32.cont [14/16] 0.0, 128
    %594 = vxpose.xlu0.b32.cont [15/16] 0.0, 128
    %595 = vxpose.xlu0.b32.end [16/16] 0.0, 128
    %v596 = vpop.trf.xlu0
    %v597 = vpop.trf.xlu0
    %v598 = vpop.trf.xlu0
    %v599 = vpop.trf.xlu0
    %v600 = vpop.trf.xlu0
    %v601 = vpop.trf.xlu0
    %v602 = vpop.trf.xlu0
    %v603 = vpop.trf.xlu0
    %v604 = vpop.trf.xlu0
    %v605 = vpop.trf.xlu0
    %v606 = vpop.trf.xlu0
    %v607 = vpop.trf.xlu0
    %v608 = vpop.trf.xlu0
    %v609 = vpop.trf.xlu0
    %v610 = vpop.trf.xlu0
    %v611 = vpop.trf.xlu0
    %vm612 = vcmask 188416
    %613 = vst.msk [vmem:[#allocation2] sm:$0x1] %vm612, %v596
    // Predicated region
    $region22: #{tpu_custom_call.1} parent=1 // pred_check
      _
    $region23: #{tpu_custom_call.1} parent=1 // pred_check_branch
      %615 = sbr.rel (0) target = $region25
    $region24: #{tpu_custom_call.1} parent=1 // pred_region
      %s617 = ssub.s32 16, 16
      %618 = vsyncadd [#allocation3], %s617
      %s620 = sshll.u32 [#allocation2], 4
      %s621 = int_to_ptr.vmem [resolvable:$true] %s620
      %623 = dma.vmem_to_hbm [thread:$0]  %s621, 16, %s5, [#allocation3]
    $region25: #{tpu_custom_call.1} parent=1 // pred_fallthru
      _
    // Predicated region
    $region26: #{tpu_custom_call.1} parent=1 // pred_check
      _
    $region27: #{tpu_custom_call.1} parent=1 // pred_check_branch
      %625 = sbr.rel (0) target = $region29
    $region28: #{tpu_custom_call.1} parent=1 // pred_region
      %626 = dma.done [#allocation3], 16
    $region29: #{tpu_custom_call.1} parent=1 // pred_fallthru
      _
    %627 = vsyncpa [#allocation3], 1

</llo_original>
